<compile_context>
chip_gen: v7x
topology: tpu7x:2x2x1
jax: 0.10.0
libtpu: 0.0.40
codegen_flags: <defaults>
</compile_context>

<pallas_src>
import functools

import jax
import jax.numpy as jnp
from jax.experimental import pallas as pl
from jax.experimental.pallas import tpu as pltpu

LANES = 128
SUBLANES = 8


def _tile_params():
    """(max_block_rows, vmem_limit_bytes) per TPU generation."""
    try:
        vmem_bytes = pltpu.get_tpu_info().vmem_capacity_bytes
    except Exception:                      # unknown part: be conservative
        vmem_bytes = 64 * 1024 * 1024
    if vmem_bytes >= 100 * 1024 * 1024:    # v5e / v6e: 128 MiB VMEM
        return 8192, 96 * 1024 * 1024
    return 4096, 48 * 1024 * 1024          # v7x: 64 MiB per TensorCore


def _focal_terms(x, y, alpha, gamma):
    """Per-element focal-loss terms (f32 in / f32 out). Shared by kernel & tail."""
    # sigmoid via tanh: a single EUP push, no f32 divide / compare / select.
    probs = 0.5 * jnp.tanh(0.5 * x) + 0.5
    # Stable log-sigmoid (matches the selected branches of the PyTorch
    # softplus-based forward; the threshold-50 linearization never triggers on
    # a selected branch):
    #   L = log1p(exp(-|x|))
    #   log(sigmoid(x))     = min(x, 0) - L
    #   log(1 - sigmoid(x)) = log(sigmoid(x)) - x
    L = jnp.log1p(jnp.exp(-jnp.abs(x)))
    log_probs = jnp.minimum(x, 0.0) - L
    log_1_probs = log_probs - x

    g = float(gamma)
    if g == float(int(g)) and int(g) % 2 == 0:
        d = y - probs                                # even power: |.| redundant
        coeff = -(d * d) if int(g) == 2 else -(d ** int(g))
    elif g == float(int(g)):
        coeff = -(jnp.abs(y - probs) ** int(g))      # odd integer power
    else:
        coeff = -(jnp.abs(y - probs) ** jnp.float32(g))

    return coeff * (y * alpha * log_probs
                    + (1.0 - y) * (1.0 - alpha) * log_1_probs)


def _focal_loss_sum_kernel(x_ref, y_ref, out_ref, acc_ref, *,
                           alpha, gamma, n_rows, block_rows,
                           tiles_per_core, needs_mask):
    c = pl.program_id(0)              # core (parallel) index
    j = pl.program_id(1)              # per-core tile (reduction) index
    last_j = pl.num_programs(1) - 1

    @pl.when(j == 0)
    def _init():
        acc_ref[...] = jnp.zeros_like(acc_ref)

    x = x_ref[...].astype(jnp.float32)   # logits tile (block_rows, LANES)
    y = y_ref[...].astype(jnp.float32)   # labels tile (block_rows, LANES)
    loss = _focal_terms(x, y, alpha, gamma)

    def _accumulate(tile):
        # (block_rows,128) -> (block_rows//8, 8, 128) lands exactly on (8,128)
        # vreg tile boundaries, so this lowers to pure vreg adds into the
        # persistent accumulator (no per-step XLU / scalar work).  If a Mosaic
        # dump ever shows a materialized relayout here, switch to a
        # lax.fori_loop accumulating acc_ref[...] += tile[pl.ds(8*k, 8), :].
        acc_ref[...] += jnp.sum(tile.reshape(-1, SUBLANES, LANES), axis=0)

    if needs_mask:
        gb = c * tiles_per_core + j          # global tile index (scalar)
        n_full = n_rows // block_rows        # tiles wholly in range

        @pl.when(gb < n_full)
        def _full():
            _accumulate(loss)

        @pl.when(gb >= n_full)
        def _ragged():
            row = jax.lax.broadcasted_iota(jnp.int32, loss.shape, 0)
            row_global = gb * block_rows + row   # row compare: no flat-index overflow
            _accumulate(jnp.where(row_global < n_rows, loss, 0.0))
    else:
        _accumulate(loss)

    @pl.when(j == last_j)
    def _finalize():
        out_ref[0, 0] = jnp.sum(acc_ref[...])    # one cross-lane reduce per core


def focal_loss(logits, label, alpha=0.25, gamma=2, reduction="sum",
               *, _max_block_rows=None):
    """Pallas implementation of FocalLoss.forward (reduction 'sum' or 'mean').

    Inputs may be any float (or {0,1} integer label) dtype; they are DMA'd in
    their native dtype and cast to f32 inside the kernel, so bf16 inputs halve
    HBM traffic.  Callers should NOT up-cast before calling.
    """
    assert logits.shape == label.shape
    total = int(logits.size)
    alpha = float(alpha)

    x_flat = logits.reshape(-1)
    y_flat = label.reshape(-1)

    # The kernel consumes a lane/sublane-aligned (n_rows, 128) slab with n_rows
    # a multiple of 8; any ragged tail (< 1024 elements) is folded in with a
    # tiny plain-JAX sum instead of a full-array jnp.pad pre-pass.
    chunk = SUBLANES * LANES
    n_rows = (total // chunk) * SUBLANES
    aligned = n_rows * LANES

    if aligned < total:
        tail = jnp.sum(_focal_terms(x_flat[aligned:].astype(jnp.float32),
                                    y_flat[aligned:].astype(jnp.float32),
                                    alpha, gamma))
    else:
        tail = jnp.float32(0.0)

    if n_rows == 0:
        s = tail
    else:
        # Free reshape when aligned == total (the common case); the ragged case
        # pays one prefix-slice pass, still cheaper/cleaner than padding both.
        x2 = x_flat[:aligned].reshape(n_rows, LANES)
        y2 = y_flat[:aligned].reshape(n_rows, LANES)

        max_rows, vmem_limit = _tile_params()
        if _max_block_rows is not None:            # test hook
            max_rows = int(_max_block_rows)
        block_rows = min(max_rows, n_rows)
        n_blocks = -(-n_rows // block_rows)
        num_cores = 2 if n_blocks >= 2 else 1      # v7x dual-TC split
        tiles_per_core = -(-n_blocks // num_cores)
        needs_mask = (num_cores * tiles_per_core * block_rows) != n_rows

        def in_map(c, j):
            # Clamp the (at most one) past-the-end duplicate tile when
            # n_blocks is odd; its contribution is masked to zero in-kernel.
            return (jnp.minimum(c * tiles_per_core + j, n_blocks - 1), 0)

        kernel = functools.partial(
            _focal_loss_sum_kernel,
            alpha=alpha, gamma=gamma, n_rows=n_rows, block_rows=block_rows,
            tiles_per_core=tiles_per_core, needs_mask=needs_mask)

        partials = pl.pallas_call(
            kernel,
            out_shape=jax.ShapeDtypeStruct((num_cores, 1), jnp.float32),
            grid=(num_cores, tiles_per_core),
            in_specs=[
                pl.BlockSpec((block_rows, LANES), in_map),
                pl.BlockSpec((block_rows, LANES), in_map),
            ],
            out_specs=pl.BlockSpec((1, 1), lambda c, j: (c, 0),
                                   memory_space=pltpu.SMEM),
            scratch_shapes=[pltpu.VMEM((SUBLANES, LANES), jnp.float32)],
            compiler_params=pltpu.CompilerParams(
                dimension_semantics=("parallel", "arbitrary"),
                vmem_limit_bytes=vmem_limit,
            ),
        )(x2, y2)

        s = jnp.sum(partials) + tail

    if reduction == "sum":
        return s
    if reduction == "mean":
        return s / jnp.float32(total)
    # TODO(synk): reduction='none' (per-element output) not wired up; module default is 'sum'.
    raise NotImplementedError(reduction)


def _focal_loss_ref(logits, label, alpha=0.25, gamma=2):
    """Pure-JAX reference mirroring the PyTorch forward (reduction='sum')."""
    x = logits.astype(jnp.float32)
    y = label.astype(jnp.float32)
    probs = jax.nn.sigmoid(x)
    coeff = -(jnp.abs(y - probs) ** gamma)
    sp_neg = jnp.where(-x > 50.0, x, -jnp.log1p(jnp.exp(-x)))   # softplus(x, -1, 50)
    sp_pos = jnp.where(x > 50.0, x, jnp.log1p(jnp.exp(x)))      # softplus(x,  1, 50)
    log_probs = jnp.where(x >= 0.0, sp_neg, x - sp_pos)
    log_1_probs = jnp.where(x >= 0.0, -x + sp_neg, -sp_pos)
    loss = y * alpha * log_probs + (1.0 - y) * (1.0 - alpha) * log_1_probs
    return jnp.sum(loss * coeff)


if __name__ == "__main__":
    key = jax.random.PRNGKey(0)
    k1, k2, k3, k4 = jax.random.split(key, 4)

    # Small NCHW shapes consistent with the module's docstring usage.
    N, C, H, W = 2, 4, 16, 16
    logits = jax.random.normal(k1, (N, C, H, W), dtype=jnp.float32)
    label = (jax.random.uniform(k2, (N, C, H, W)) < 0.5).astype(jnp.float32)

    loss = jax.block_until_ready(focal_loss(logits, label, alpha=0.25, gamma=2))
    ref = jax.block_until_ready(_focal_loss_ref(logits, label))
    assert jnp.allclose(loss, ref, rtol=2e-5, atol=1e-3), (loss, ref)

    # mean reduction
    loss_m = jax.block_until_ready(focal_loss(logits, label, reduction="mean"))
    assert jnp.allclose(loss_m, ref / logits.size, rtol=2e-5, atol=1e-5), (loss_m, ref / logits.size)

    # Exercise the dual-core grid + partial-tile row masking (forced small tiles).
    logits3 = jax.random.normal(k3, (2, 4, 12, 32), dtype=jnp.float32)   # 24 rows
    label3 = (jax.random.uniform(k4, (2, 4, 12, 32)) < 0.5).astype(jnp.float32)
    ref3 = _focal_loss_ref(logits3, label3)
    loss3a = jax.block_until_ready(focal_loss(logits3, label3, _max_block_rows=16))
    assert jnp.allclose(loss3a, ref3, rtol=2e-5, atol=1e-3), (loss3a, ref3)
    loss3b = jax.block_until_ready(focal_loss(logits3, label3, _max_block_rows=8))
    assert jnp.allclose(loss3b, ref3, rtol=2e-5, atol=1e-3), (loss3b, ref3)

    # Ragged element counts: kernel prefix + plain-JAX tail, and tail-only.
    logits4 = jax.random.normal(k1, (2, 4, 16, 17), dtype=jnp.float32)   # 2176 elems
    label4 = (jax.random.uniform(k2, (2, 4, 16, 17)) < 0.5).astype(jnp.float32)
    loss4 = jax.block_until_ready(focal_loss(logits4, label4))
    ref4 = _focal_loss_ref(logits4, label4)
    assert jnp.allclose(loss4, ref4, rtol=2e-5, atol=1e-3), (loss4, ref4)

    logits5 = jax.random.normal(k3, (3, 5, 7, 9), dtype=jnp.float32)     # 945 elems
    label5 = (jax.random.uniform(k4, (3, 5, 7, 9)) < 0.5).astype(jnp.float32)
    loss5 = jax.block_until_ready(focal_loss(logits5, label5))
    ref5 = _focal_loss_ref(logits5, label5)
    assert jnp.allclose(loss5, ref5, rtol=2e-5, atol=1e-3), (loss5, ref5)

    print("KERNEL_OK")
</pallas_src>

<mosaic_0001>
module attributes {stable_mosaic.version = 11 : i64} {
  func.func @_focal_loss_sum_kernel(%arg0: i32, %arg1: i32, %arg2: memref<16x128xf32, #tpu.memory_space<vmem>>, %arg3: memref<16x128xf32, #tpu.memory_space<vmem>>, %arg4: memref<1x1xf32, #tpu.memory_space<smem>>, %arg5: memref<8x128xf32, #tpu.memory_space<vmem>>) attributes {dimension_semantics = [#tpu.dimension_semantics<parallel>, #tpu.dimension_semantics<arbitrary>], iteration_bounds = array<i64: 1, 1>, scalar_prefetch = 0 : i64, scratch_operands = 1 : i64, tpu.core_type = #tpu.core_type<tc>, window_params = [{transform_indices = @transform_0, window_bounds = array<i64: 16, 128>}, {transform_indices = @transform_1, window_bounds = array<i64: 16, 128>}, {transform_indices = @transform_2, window_bounds = array<i64: 1, 1>}]} {
    %c0_i32 = arith.constant 0 : i32
    %0 = arith.cmpi eq, %arg1, %c0_i32 : i32
    %1 = arith.extui %0 : i1 to i32
    %c0_i32_0 = arith.constant 0 : i32
    %2 = arith.cmpi ne, %1, %c0_i32_0 : i32
    scf.if %2 {
      %cst_19 = arith.constant 0.000000e+00 : f32
      %43 = vector.broadcast %cst_19 : f32 to vector<8x128xf32>
      %c0_20 = arith.constant 0 : index
      %c0_21 = arith.constant 0 : index
      %44 = vector.load %arg5[%c0_20, %c0_21] : memref<8x128xf32, #tpu.memory_space<vmem>>, vector<8x128xf32>
      tpu.vector_store %arg5[%c0_20, %c0_21], %43 {strides = array<i32>} : memref<8x128xf32, #tpu.memory_space<vmem>>, vector<8x128xf32>,
    } else {
    }
    %c0 = arith.constant 0 : index
    %c0_1 = arith.constant 0 : index
    %3 = vector.load %arg2[%c0, %c0_1] : memref<16x128xf32, #tpu.memory_space<vmem>>, vector<16x128xf32>
    %c0_2 = arith.constant 0 : index
    %c0_3 = arith.constant 0 : index
    %4 = vector.load %arg3[%c0_2, %c0_3] : memref<16x128xf32, #tpu.memory_space<vmem>>, vector<16x128xf32>
    %cst = arith.constant 5.000000e-01 : f32
    %5 = vector.broadcast %cst : f32 to vector<16x128xf32>
    %6 = arith.mulf %5, %3 : vector<16x128xf32>
    %7 = math.tanh %6 : vector<16x128xf32>
    %cst_4 = arith.constant 5.000000e-01 : f32
    %8 = vector.broadcast %cst_4 : f32 to vector<16x128xf32>
    %9 = arith.mulf %8, %7 : vector<16x128xf32>
    %cst_5 = arith.constant 5.000000e-01 : f32
    %10 = vector.broadcast %cst_5 : f32 to vector<16x128xf32>
    %11 = arith.addf %9, %10 : vector<16x128xf32>
    %12 = math.absf %3 : vector<16x128xf32>
    %cst_6 = arith.constant 0.000000e+00 : f32
    %13 = vector.broadcast %cst_6 : f32 to vector<16x128xf32>
    %14 = arith.subf %13, %12 : vector<16x128xf32>
    %15 = math.exp %14 : vector<16x128xf32>
    %16 = math.log1p %15 : vector<16x128xf32>
    %cst_7 = arith.constant 0.000000e+00 : f32
    %17 = vector.broadcast %cst_7 : f32 to vector<16x128xf32>
    %18 = arith.minimumf %3, %17 : vector<16x128xf32>
    %19 = arith.subf %18, %16 : vector<16x128xf32>
    %20 = arith.subf %19, %3 : vector<16x128xf32>
    %21 = arith.subf %4, %11 : vector<16x128xf32>
    %22 = arith.mulf %21, %21 : vector<16x128xf32>
    %cst_8 = arith.constant 0.000000e+00 : f32
    %23 = vector.broadcast %cst_8 : f32 to vector<16x128xf32>
    %24 = arith.subf %23, %22 : vector<16x128xf32>
    %cst_9 = arith.constant 2.500000e-01 : f32
    %25 = vector.broadcast %cst_9 : f32 to vector<16x128xf32>
    %26 = arith.mulf %4, %25 : vector<16x128xf32>
    %27 = arith.mulf %26, %19 : vector<16x128xf32>
    %cst_10 = arith.constant 1.000000e+00 : f32
    %28 = vector.broadcast %cst_10 : f32 to vector<16x128xf32>
    %29 = arith.subf %28, %4 : vector<16x128xf32>
    %cst_11 = arith.constant 7.500000e-01 : f32
    %30 = vector.broadcast %cst_11 : f32 to vector<16x128xf32>
    %31 = arith.mulf %29, %30 : vector<16x128xf32>
    %32 = arith.mulf %31, %20 : vector<16x128xf32>
    %33 = arith.addf %27, %32 : vector<16x128xf32>
    %34 = arith.mulf %24, %33 : vector<16x128xf32>
    %c0_12 = arith.constant 0 : index
    %c0_13 = arith.constant 0 : index
    %35 = vector.load %arg5[%c0_12, %c0_13] : memref<8x128xf32, #tpu.memory_space<vmem>>, vector<8x128xf32>
    %36 = vector.shape_cast %34 : vector<16x128xf32> to vector<2x8x128xf32>
    %cst_14 = arith.constant dense<0.000000e+00> : vector<8x128xf32>
    %37 = vector.multi_reduction <add>, %36, %cst_14 [0] : vector<2x8x128xf32> to vector<8x128xf32>
    %38 = arith.addf %35, %37 : vector<8x128xf32>
    %c0_15 = arith.constant 0 : index
    %c0_16 = arith.constant 0 : index
    %39 = vector.load %arg5[%c0_15, %c0_16] : memref<8x128xf32, #tpu.memory_space<vmem>>, vector<8x128xf32>
    tpu.vector_store %arg5[%c0_15, %c0_16], %38 {strides = array<i32>} : memref<8x128xf32, #tpu.memory_space<vmem>>, vector<8x128xf32>,
    %c0_i32_17 = arith.constant 0 : i32
    %40 = arith.cmpi eq, %arg1, %c0_i32_17 : i32
    %41 = arith.extui %40 : i1 to i32
    %c0_i32_18 = arith.constant 0 : i32
    %42 = arith.cmpi ne, %41, %c0_i32_18 : i32
    scf.if %42 {
      %c0_19 = arith.constant 0 : index
      %c0_20 = arith.constant 0 : index
      %43 = vector.load %arg5[%c0_19, %c0_20] : memref<8x128xf32, #tpu.memory_space<vmem>>, vector<8x128xf32>
      %44 = vector.shape_cast %43 : vector<8x128xf32> to vector<1x8x128xf32>
      %cst_21 = arith.constant dense<0.000000e+00> : vector<1xf32>
      %45 = vector.multi_reduction <add>, %44, %cst_21 [1, 2] : vector<1x8x128xf32> to vector<1xf32>
      %46 = vector.shape_cast %45 : vector<1xf32> to vector<1x1x1xf32>
      %47 = vector.extract %46[0, 0, 0] : f32 from vector<1x1x1xf32>
      %c0_22 = arith.constant 0 : index
      %c0_23 = arith.constant 0 : index
      %48 = memref.load %arg4[%c0_22, %c0_23] : memref<1x1xf32, #tpu.memory_space<smem>>
      memref.store %47, %arg4[%c0_22, %c0_23] : memref<1x1xf32, #tpu.memory_space<smem>>
    } else {
    }
    return
  }
  func.func @transform_0(%arg0: i32, %arg1: i32) -> (i32, i32) {
    %c1_i32 = arith.constant 1 : i32
    %0 = arith.muli %arg0, %c1_i32 : i32
    %1 = arith.addi %0, %arg1 : i32
    %c0_i32 = arith.constant 0 : i32
    %2 = arith.minsi %1, %c0_i32 : i32
    %c0_i32_0 = arith.constant 0 : i32
    %c0_i32_1 = arith.constant 0 : i32
    return %2, %c0_i32_0 : i32, i32
  }
  func.func @transform_1(%arg0: i32, %arg1: i32) -> (i32, i32) {
    %c1_i32 = arith.constant 1 : i32
    %0 = arith.muli %arg0, %c1_i32 : i32
    %1 = arith.addi %0, %arg1 : i32
    %c0_i32 = arith.constant 0 : i32
    %2 = arith.minsi %1, %c0_i32 : i32
    %c0_i32_0 = arith.constant 0 : i32
    %c0_i32_1 = arith.constant 0 : i32
    return %2, %c0_i32_0 : i32, i32
  }
  func.func @transform_2(%arg0: i32, %arg1: i32) -> (i32, i32) {
    %c0_i32 = arith.constant 0 : i32
    %c0_i32_0 = arith.constant 0 : i32
    return %arg0, %c0_i32 : i32, i32
  }
}

</mosaic_0001>

<llo_original>
// kernel: tpu_custom_call.1
$region0: #{tpu_custom_call.1}
  #allocation0 [shape = 'u32[]', space=smem, size = 0x4, offset = 0x4, fixed_abs, tag = 'smem constant byte address 0x4 - core index']
  #allocation1 [shape = 'u32[144,128]{1,0:T(1,128)}', space=vmem, size = 0x12000, scoped, tag = 'internal scratch']
  #allocation2 [shape = 'f32[8,128]{1,0:T(8,128)}', space=vmem, size = 0x1000, scoped, tag = 'scratch operand']
  %s0 = inlined_call_operand.hbm [shape: f32[16,128], index: 0, kind: input, shape index: {}]
  %s1 = inlined_call_operand.hbm [shape: f32[16,128], index: 1, kind: input, shape index: {}]
  %s2 = inlined_call_operand.hbm [shape: f32[1,1], index: 2, kind: output, shape index: {}]
  %s3 = sld [smem:[#allocation0]]
  $region34: #{tpu_custom_call.1} parent=0
    _
  %s5 = ssub.s32 1, %s3
  %s6 = scalar_select 0, %s5, %s3
  $region1: #{tpu_custom_call.1} parent=0
    #allocation3 [shape = 'u8[8192]{0}', space=vmem, size = 0x2000, scoped, tag = 'input window, operand 0, single buffered']
    #allocation4 [shape = 's32[1]{0}', space=sflag, size = 0x4, scoped, tag = 'scoped memory for tpu_custom_call.1']
    #allocation5 [shape = 's32[1]{0}', space=sflag, size = 0x4, scoped, tag = 'scoped memory for tpu_custom_call.1']
    #allocation6 [shape = 'u8[8192]{0}', space=vmem, size = 0x2000, scoped, tag = 'input window, operand 1, single buffered']
    #allocation7 [shape = 's32[1]{0}', space=sflag, size = 0x4, scoped, tag = 'scoped memory for tpu_custom_call.1']
    #allocation8 [shape = 'u8[512]{0}', space=smem, size = 0x200, scoped, tag = 'output window, operand 0, single buffered']
    %7 = vsyncpa [#allocation4], 0
    %8 = vsyncpa [#allocation7], 0
    %9 = vsyncpa [#allocation5], 0
    // Predicated region
    $region2: #{tpu_custom_call.1} parent=1 // pred_check
      _
    $region3: #{tpu_custom_call.1} parent=1 // pred_check_branch
      %11 = sbr.rel (0) target = $region5
    $region4: #{tpu_custom_call.1} parent=1 // pred_region
      %s12 = sadd.s32 0, 0
      %p13 = scmp.lt.s32.totalorder %s12, 0
      %s14 = scalar_select %p13, %s12, 0
      %s15 = smul.u32 2, %s14
      %s17 = ssub.s32 256, 256
      %18 = vsyncadd [#allocation4], %s17
      %s19 = smul.addr %s15, 128
      %s20 = scalar_lea.hbm %s0, %s19
      %s21 = sshll.u32 [#allocation3], 4
      %s22 = int_to_ptr.vmem [resolvable:$true] %s21
      %27 = dma.hbm_to_vmem [thread:$0]  %s20, 256, %s22, [#allocation4], 128, 128, 8
    $region5: #{tpu_custom_call.1} parent=1 // pred_fallthru
      _
    // Predicated region
    $region6: #{tpu_custom_call.1} parent=1 // pred_check
      _
    $region7: #{tpu_custom_call.1} parent=1 // pred_check_branch
      %29 = sbr.rel (0) target = $region9
    $region8: #{tpu_custom_call.1} parent=1 // pred_region
      %s30 = sadd.s32 0, 0
      %p31 = scmp.lt.s32.totalorder %s30, 0
      %s32 = scalar_select %p31, %s30, 0
      %s33 = smul.u32 2, %s32
      %s35 = ssub.s32 256, 256
      %36 = vsyncadd [#allocation7], %s35
      %s37 = smul.addr %s33, 128
      %s38 = scalar_lea.hbm %s1, %s37
      %s39 = sshll.u32 [#allocation6], 4
      %s40 = int_to_ptr.vmem [resolvable:$true] %s39
      %45 = dma.hbm_to_vmem [thread:$0]  %s38, 256, %s40, [#allocation7], 128, 128, 8
    $region9: #{tpu_custom_call.1} parent=1 // pred_fallthru
      _
    // Predicated region
    $region10: #{tpu_custom_call.1} parent=1 // pred_check
      _
    $region11: #{tpu_custom_call.1} parent=1 // pred_check_branch
      %47 = sbr.rel (0) target = $region13
    $region12: #{tpu_custom_call.1} parent=1 // pred_region
      %48 = dma.done [#allocation4], 256
    $region13: #{tpu_custom_call.1} parent=1 // pred_fallthru
      _
    // Predicated region
    $region14: #{tpu_custom_call.1} parent=1 // pred_check
      _
    $region15: #{tpu_custom_call.1} parent=1 // pred_check_branch
      %50 = sbr.rel (0) target = $region17
    $region16: #{tpu_custom_call.1} parent=1 // pred_region
      %51 = dma.done [#allocation7], 256
    $region17: #{tpu_custom_call.1} parent=1 // pred_fallthru
      _
    %s52 = sadd.s32 0, 0
    %p53 = scmp.lt.s32.totalorder %s52, 0
    %s54 = scalar_select %p53, %s52, 0
    %s55 = smul.u32 2, %s54
    %s56 = sadd.s32 0, 0
    %p57 = scmp.lt.s32.totalorder %s56, 0
    %s58 = scalar_select %p57, %s56, 0
    %s59 = smul.u32 2, %s58
    %p60 = scmp.eq.s32.totalorder 0, 0
    // Predicated region
    $region18: #{tpu_custom_call.1} parent=1 // pred_check
      %p61 = pneg %p60
    $region19: #{tpu_custom_call.1} parent=1 // pred_check_branch
      %63 = sbr.rel (%p61) target = $region21
    $region20: #{tpu_custom_call.1} parent=1 // pred_region
      %64 = vst [vmem:[#allocation2] sm:$0xff] 0.0
    $region21: #{tpu_custom_call.1} parent=1 // pred_fallthru
      _
    %v65 = vld [vmem:[#allocation3] sm:$0xff]
    %v66 = vld [vmem:[#allocation3 + $0x8] sm:$0xff]
    %v67 = vld [vmem:[#allocation6] sm:$0xff]
    %v68 = vld [vmem:[#allocation6 + $0x8] sm:$0xff]
    %v69 = vmul.f32 %v65, 0.5
    %v70 = vmul.f32 %v66, 0.5
    %v71 = vtanh.pop %v69
    %v72 = vtanh.pop %v70
    %v73 = vmul.f32 %v71, 0.5
    %v74 = vmul.f32 %v72, 0.5
    %v75 = vadd.f32 %v73, 0.5
    %v76 = vadd.f32 %v74, 0.5
    %v77 = vand.u32 2147483647, %v65
    %v78 = vand.u32 2147483647, %v66
    %v79 = vsub.f32 0.0, %v77
    %v80 = vsub.f32 0.0, %v78
    %v81 = vmul.f32 %v79, 1.442695
    %v82 = vpow.pop %v81
    %v83 = vmul.f32 %v80, 1.442695
    %v84 = vpow.pop %v83
    %v85 = vadd.f32 %v82, 1.0
    %v86 = vlog2.pop %v85
    %v87 = vmul.f32 %v86, 0.6931472
    %v88 = vmul.f32 -0.5, %v82
    %v89 = vadd.f32 %v88, 1.0
    %v90 = vmul.f32 %v89, %v82
    %v91 = vand.u32 2147483647, %v82
    %vm92 = vcmp.lt.f32.partialorder %v91, 0.0004427343
    %v93 = vsel %vm92, %v90, %v87
    %v94 = vadd.f32 %v84, 1.0
    %v95 = vlog2.pop %v94
    %v96 = vmul.f32 %v95, 0.6931472
    %v97 = vmul.f32 -0.5, %v84
    %v98 = vadd.f32 %v97, 1.0
    %v99 = vmul.f32 %v98, %v84
    %v100 = vand.u32 2147483647, %v84
    %vm101 = vcmp.lt.f32.partialorder %v100, 0.0004427343
    %v102 = vsel %vm101, %v99, %v96
    %v103 = vmin.f32 %v65, 0.0
    %v104 = vmin.f32 %v66, 0.0
    %v105 = vsub.f32 %v103, %v93
    %v106 = vsub.f32 %v104, %v102
    %v107 = vsub.f32 %v105, %v65
    %v108 = vsub.f32 %v106, %v66
    %v109 = vsub.f32 %v67, %v75
    %v110 = vsub.f32 %v68, %v76
    %v111 = vmul.f32 %v109, %v109
    %v112 = vmul.f32 %v110, %v110
    %v113 = vsub.f32 0.0, %v111
    %v114 = vsub.f32 0.0, %v112
    %v115 = vmul.f32 %v67, 0.25
    %v116 = vmul.f32 %v68, 0.25
    %v117 = vmul.f32 %v115, %v105
    %v118 = vmul.f32 %v116, %v106
    %v119 = vsub.f32 1.0, %v67
    %v120 = vsub.f32 1.0, %v68
    %v121 = vmul.f32 %v119, 0.75
    %v122 = vmul.f32 %v120, 0.75
    %v123 = vmul.f32 %v121, %v107
    %v124 = vmul.f32 %v122, %v108
    %v125 = vadd.f32 %v117, %v123
    %v126 = vadd.f32 %v118, %v124
    %v127 = vmul.f32 %v113, %v125
    %v128 = vmul.f32 %v114, %v126
    %v129 = vld [vmem:[#allocation2] sm:$0xff]
    %v130 = vadd.f32 %v127, %v128
    %v131 = vadd.f32 %v129, %v130
    %132 = vst [vmem:[#allocation2] sm:$0xff] %v131
    // Predicated region
    $region22: #{tpu_custom_call.1} parent=1 // pred_check
      %p133 = pneg %p60
    $region23: #{tpu_custom_call.1} parent=1 // pred_check_branch
      %135 = sbr.rel (%p133) target = $region25
    $region24: #{tpu_custom_call.1} parent=1 // pred_region
      %v136 = vld [vmem:[#allocation2] sm:$0xff]
      %137 = vadd.xlane.f32.xlu0 %v136
      %v138 = vpop.xlane.xlu0 %137
      %v139 = vrot.slane %v138, 4
      %v140 = vadd.f32 %v138, %v139
      %v141 = vrot.slane %v140, 2
      %v142 = vadd.f32 %v140, %v141
      %v143 = vrot.slane %v142, 1
      %v144 = vadd.f32 %v142, %v143
      %s145 = vtos %v144
      %s146 = scalar_lea.smem [#allocation8], 0
      %147 = sst [smem:[%s146]] %s145
    $region25: #{tpu_custom_call.1} parent=1 // pred_fallthru
      _
    // Predicated region
    $region26: #{tpu_custom_call.1} parent=1 // pred_check
      _
    $region27: #{tpu_custom_call.1} parent=1 // pred_check_branch
      %149 = sbr.rel (0) target = $region29
    $region28: #{tpu_custom_call.1} parent=1 // pred_region
      %s151 = ssub.s32 16, 16
      %152 = vsyncadd [#allocation5], %s151
      %155 = dma.smem_to_hbm [#allocation8], 16, %s2, [#allocation5]
    $region29: #{tpu_custom_call.1} parent=1 // pred_fallthru
      _
    // Predicated region
    $region30: #{tpu_custom_call.1} parent=1 // pred_check
      _
    $region31: #{tpu_custom_call.1} parent=1 // pred_check_branch
      %157 = sbr.rel (0) target = $region33
    $region32: #{tpu_custom_call.1} parent=1 // pred_region
      %158 = dma.done [#allocation5], 16
    $region33: #{tpu_custom_call.1} parent=1 // pred_fallthru
      _
    %159 = sfence
    %160 = vsyncpa [#allocation4], 1
    %161 = vsyncpa [#allocation7], 1
    %162 = vsyncpa [#allocation5], 1

</llo_original>
